<compile_context>
chip_gen: v7x
topology: tpu7x:2x2x1
jax: 0.10.0
libtpu: 0.0.40
codegen_flags: <defaults>
</compile_context>

<pallas_src>
import functools

import jax
import jax.numpy as jnp
from jax.experimental import pallas as pl
from jax.experimental.pallas import tpu as pltpu

EPS = 1e-5

# Per-grid-step VMEM budget for the batch-tile chooser: ~6x the f32 block
# (2 double-buffered input copies + 2 output copies + in-kernel f32 temps).
_VMEM_BLOCK_BUDGET = 24 * 1024 * 1024
_VMEM_LIMIT_BYTES = 48 * 1024 * 1024


def _pick_batch_tile(B, L, C, budget_bytes=_VMEM_BLOCK_BUDGET):
    """Largest divisor of B whose (TB, L, C) working set fits the VMEM budget,
    preferring >= 2 grid steps so both v7x TensorCores get work."""
    per_row = L * C * 4 * 6  # f32 bytes per batch row, x6 for buffers/temps
    tb = 1
    for d in range(1, B + 1):
        if B % d == 0 and d * per_row <= budget_bytes:
            tb = d
    if B >= 2 and tb == B:
        for d in range(B // 2, 0, -1):
            if B % d == 0:
                tb = d
                break
    # TODO(synk): for sequences so long that even TB=1 exceeds the budget,
    # add a second "arbitrary" grid axis over L with sum/sumsq scratch
    # accumulators and a pl.when finalize (second pass to normalize).
    return max(tb, 1)


# --------------------------------------------------------------------------- #
# Kernels
# --------------------------------------------------------------------------- #
def _revin_norm_kernel(x_ref, w_ref, b_ref, y_ref, mean_ref, std_ref, *,
                       eps, inv_l):
    x = x_ref[...].astype(jnp.float32)                        # (TB, L, C)

    # Single-pass statistics: two independent full-tile sublane reductions
    # (XLU slot, essentially free under the HBM-bound regime).
    mean = jnp.sum(x, axis=1, keepdims=True) * inv_l          # (TB, 1, C)
    ex2 = jnp.sum(x * x, axis=1, keepdims=True) * inv_l       # (TB, 1, C)
    var = jnp.maximum(ex2 - mean * mean, 0.0)                 # clamp cancellation

    var_eps = var + eps
    std = jnp.sqrt(var_eps)                                   # tiny, exact vs ref
    inv_std = jax.lax.rsqrt(var_eps)                          # EUP, tiny

    # Fold ((x - mean) / std) * w + b into one full-tile FMA.
    scale = w_ref[...] * inv_std                              # (TB, 1, C)
    shift = b_ref[...] - mean * scale                         # (TB, 1, C)

    y_ref[...] = (x * scale + shift).astype(y_ref.dtype)
    mean_ref[...] = mean.astype(mean_ref.dtype)
    std_ref[...] = std.astype(std_ref.dtype)


def _revin_denorm_kernel(x_ref, mean_ref, std_ref, w_ref, b_ref, y_ref, *, eps):
    x = x_ref[...].astype(jnp.float32)                        # (TB, L, C)
    mean = mean_ref[...].astype(jnp.float32)                  # (TB, 1, C)
    std = std_ref[...].astype(jnp.float32)                    # (TB, 1, C)

    # Fold ((x - b) / (w + eps^2)) * std + mean into one full-tile FMA;
    # the divide only touches the tiny (TB, 1, C) per-channel vector.
    scale = std / (w_ref[...] + eps * eps)                    # (TB, 1, C)
    shift = mean - b_ref[...] * scale                         # (TB, 1, C)

    y_ref[...] = (x * scale + shift).astype(y_ref.dtype)


# --------------------------------------------------------------------------- #
# Wrappers
# --------------------------------------------------------------------------- #
def revin_norm(x, affine_weight, affine_bias, eps=EPS):
    """mode='norm': returns (x_norm, mean, stdev)."""
    B, L, C = x.shape
    w = affine_weight.reshape(1, 1, C).astype(jnp.float32)
    b = affine_bias.reshape(1, 1, C).astype(jnp.float32)

    tb = _pick_batch_tile(B, L, C)
    grid = (B // tb,)

    out_shapes = (
        jax.ShapeDtypeStruct((B, L, C), x.dtype),        # normalized x
        jax.ShapeDtypeStruct((B, 1, C), jnp.float32),    # mean
        jax.ShapeDtypeStruct((B, 1, C), jnp.float32),    # stdev
    )

    return pl.pallas_call(
        functools.partial(_revin_norm_kernel, eps=float(eps), inv_l=1.0 / L),
        out_shape=out_shapes,
        grid=grid,
        in_specs=[
            pl.BlockSpec((tb, L, C), lambda i: (i, 0, 0)),
            pl.BlockSpec((1, 1, C), lambda i: (0, 0, 0)),
            pl.BlockSpec((1, 1, C), lambda i: (0, 0, 0)),
        ],
        out_specs=(
            pl.BlockSpec((tb, L, C), lambda i: (i, 0, 0)),
            pl.BlockSpec((tb, 1, C), lambda i: (i, 0, 0)),
            pl.BlockSpec((tb, 1, C), lambda i: (i, 0, 0)),
        ),
        compiler_params=pltpu.CompilerParams(
            dimension_semantics=("parallel",),
            vmem_limit_bytes=_VMEM_LIMIT_BYTES),
    )(x, w, b)


def revin_denorm(x, mean, stdev, affine_weight, affine_bias, eps=EPS):
    """mode='denorm': returns de-normalized x."""
    B, L, C = x.shape
    w = affine_weight.reshape(1, 1, C).astype(jnp.float32)
    b = affine_bias.reshape(1, 1, C).astype(jnp.float32)

    tb = _pick_batch_tile(B, L, C)
    grid = (B // tb,)

    return pl.pallas_call(
        functools.partial(_revin_denorm_kernel, eps=float(eps)),
        out_shape=jax.ShapeDtypeStruct((B, L, C), x.dtype),
        grid=grid,
        in_specs=[
            pl.BlockSpec((tb, L, C), lambda i: (i, 0, 0)),
            pl.BlockSpec((tb, 1, C), lambda i: (i, 0, 0)),
            pl.BlockSpec((tb, 1, C), lambda i: (i, 0, 0)),
            pl.BlockSpec((1, 1, C), lambda i: (0, 0, 0)),
            pl.BlockSpec((1, 1, C), lambda i: (0, 0, 0)),
        ],
        out_specs=pl.BlockSpec((tb, L, C), lambda i: (i, 0, 0)),
        compiler_params=pltpu.CompilerParams(
            dimension_semantics=("parallel",),
            vmem_limit_bytes=_VMEM_LIMIT_BYTES),
    )(x, mean, stdev, w, b)


# --------------------------------------------------------------------------- #
# Pure-JAX reference (mirrors the PyTorch module)
# --------------------------------------------------------------------------- #
def _ref_norm(x, w, b, eps=EPS):
    mean = jnp.mean(x, axis=1, keepdims=True)
    var = jnp.var(x, axis=1, keepdims=True)  # biased (unbiased=False)
    std = jnp.sqrt(var + eps)
    y = (x - mean) / std * w.reshape(1, 1, -1) + b.reshape(1, 1, -1)
    return y, mean, std


def _ref_denorm(x, mean, std, w, b, eps=EPS):
    y = (x - b.reshape(1, 1, -1)) / (w.reshape(1, 1, -1) + eps * eps)
    return y * std + mean


if __name__ == "__main__":
    key = jax.random.PRNGKey(0)
    B, L, C = 2, 8, 4  # batch, seq, num_features

    x = jax.random.normal(key, (B, L, C), dtype=jnp.float32) * 3.0 + 1.5

    # deterministic parameter init, matching nn.Parameter(ones)/(zeros)
    affine_weight = jnp.ones((C,), dtype=jnp.float32)
    affine_bias = jnp.zeros((C,), dtype=jnp.float32)

    # mode='norm'
    y_norm, mean, stdev = revin_norm(x, affine_weight, affine_bias)
    jax.block_until_ready((y_norm, mean, stdev))

    # mode='denorm' (uses statistics produced by the 'norm' pass)
    y_denorm = revin_denorm(y_norm, mean, stdev, affine_weight, affine_bias)
    jax.block_until_ready(y_denorm)

    # correctness checks against pure-JAX reference
    ref_y, ref_mean, ref_std = _ref_norm(x, affine_weight, affine_bias)
    ref_back = _ref_denorm(ref_y, ref_mean, ref_std, affine_weight, affine_bias)

    assert jnp.allclose(y_norm, ref_y, atol=1e-5, rtol=1e-5)
    assert jnp.allclose(mean, ref_mean, atol=1e-5, rtol=1e-5)
    assert jnp.allclose(stdev, ref_std, atol=1e-5, rtol=1e-5)
    assert jnp.allclose(y_denorm, ref_back, atol=1e-5, rtol=1e-5)
    assert jnp.allclose(y_denorm, x, atol=1e-4, rtol=1e-4)  # round-trip

    print("KERNEL_OK")
</pallas_src>

<mosaic_0001>
module attributes {stable_mosaic.version = 11 : i64} {
  func.func @_revin_norm_kernel(%arg0: i32, %arg1: memref<1x8x4xf32, #tpu.memory_space<vmem>>, %arg2: memref<1x1x4xf32, #tpu.memory_space<vmem>>, %arg3: memref<1x1x4xf32, #tpu.memory_space<vmem>>, %arg4: memref<1x8x4xf32, #tpu.memory_space<vmem>>, %arg5: memref<1x1x4xf32, #tpu.memory_space<vmem>>, %arg6: memref<1x1x4xf32, #tpu.memory_space<vmem>>) attributes {dimension_semantics = [#tpu.dimension_semantics<parallel>], iteration_bounds = array<i64: 2>, scalar_prefetch = 0 : i64, scratch_operands = 0 : i64, tpu.core_type = #tpu.core_type<tc>, window_params = [{transform_indices = @transform_0, window_bounds = array<i64: 1, 8, 4>}, {pipeline_mode = #tpu.pipeline_mode<synchronous>, transform_indices = @transform_1, window_bounds = array<i64: 1, 1, 4>}, {pipeline_mode = #tpu.pipeline_mode<synchronous>, transform_indices = @transform_2, window_bounds = array<i64: 1, 1, 4>}, {transform_indices = @transform_3, window_bounds = array<i64: 1, 8, 4>}, {transform_indices = @transform_4, window_bounds = array<i64: 1, 1, 4>}, {transform_indices = @transform_5, window_bounds = array<i64: 1, 1, 4>}]} {
    %c0 = arith.constant 0 : index
    %c0_0 = arith.constant 0 : index
    %c0_1 = arith.constant 0 : index
    %0 = vector.load %arg1[%c0, %c0_0, %c0_1] : memref<1x8x4xf32, #tpu.memory_space<vmem>>, vector<1x8x4xf32>
    %cst = arith.constant dense<0.000000e+00> : vector<1x4xf32>
    %1 = vector.multi_reduction <add>, %0, %cst [1] : vector<1x8x4xf32> to vector<1x4xf32>
    %2 = vector.shape_cast %1 : vector<1x4xf32> to vector<1x1x4xf32>
    %cst_2 = arith.constant 1.250000e-01 : f32
    %3 = vector.broadcast %cst_2 : f32 to vector<1x1x4xf32>
    %4 = arith.mulf %2, %3 : vector<1x1x4xf32>
    %5 = arith.mulf %0, %0 : vector<1x8x4xf32>
    %cst_3 = arith.constant dense<0.000000e+00> : vector<1x4xf32>
    %6 = vector.multi_reduction <add>, %5, %cst_3 [1] : vector<1x8x4xf32> to vector<1x4xf32>
    %7 = vector.shape_cast %6 : vector<1x4xf32> to vector<1x1x4xf32>
    %cst_4 = arith.constant 1.250000e-01 : f32
    %8 = vector.broadcast %cst_4 : f32 to vector<1x1x4xf32>
    %9 = arith.mulf %7, %8 : vector<1x1x4xf32>
    %10 = arith.mulf %4, %4 : vector<1x1x4xf32>
    %11 = arith.subf %9, %10 : vector<1x1x4xf32>
    %cst_5 = arith.constant 0.000000e+00 : f32
    %12 = vector.broadcast %cst_5 : f32 to vector<1x1x4xf32>
    %13 = arith.maximumf %11, %12 : vector<1x1x4xf32>
    %cst_6 = arith.constant 9.99999974E-6 : f32
    %14 = vector.broadcast %cst_6 : f32 to vector<1x1x4xf32>
    %15 = arith.addf %13, %14 : vector<1x1x4xf32>
    %16 = math.sqrt %15 : vector<1x1x4xf32>
    %17 = math.rsqrt %15 : vector<1x1x4xf32>
    %c0_7 = arith.constant 0 : index
    %c0_8 = arith.constant 0 : index
    %c0_9 = arith.constant 0 : index
    %18 = vector.load %arg2[%c0_7, %c0_8, %c0_9] : memref<1x1x4xf32, #tpu.memory_space<vmem>>, vector<1x1x4xf32>
    %19 = arith.mulf %18, %17 : vector<1x1x4xf32>
    %c0_10 = arith.constant 0 : index
    %c0_11 = arith.constant 0 : index
    %c0_12 = arith.constant 0 : index
    %20 = vector.load %arg3[%c0_10, %c0_11, %c0_12] : memref<1x1x4xf32, #tpu.memory_space<vmem>>, vector<1x1x4xf32>
    %21 = arith.mulf %4, %19 : vector<1x1x4xf32>
    %22 = arith.subf %20, %21 : vector<1x1x4xf32>
    %23 = vector.broadcast %19 : vector<1x1x4xf32> to vector<1x8x4xf32>
    %24 = arith.mulf %0, %23 : vector<1x8x4xf32>
    %25 = vector.broadcast %22 : vector<1x1x4xf32> to vector<1x8x4xf32>
    %26 = arith.addf %24, %25 : vector<1x8x4xf32>
    %c0_13 = arith.constant 0 : index
    %c0_14 = arith.constant 0 : index
    %c0_15 = arith.constant 0 : index
    %27 = vector.load %arg4[%c0_13, %c0_14, %c0_15] : memref<1x8x4xf32, #tpu.memory_space<vmem>>, vector<1x8x4xf32>
    tpu.vector_store %arg4[%c0_13, %c0_14, %c0_15], %26 {strides = array<i32>} : memref<1x8x4xf32, #tpu.memory_space<vmem>>, vector<1x8x4xf32>,
    %c0_16 = arith.constant 0 : index
    %c0_17 = arith.constant 0 : index
    %c0_18 = arith.constant 0 : index
    %28 = vector.load %arg5[%c0_16, %c0_17, %c0_18] : memref<1x1x4xf32, #tpu.memory_space<vmem>>, vector<1x1x4xf32>
    tpu.vector_store %arg5[%c0_16, %c0_17, %c0_18], %4 {strides = array<i32>} : memref<1x1x4xf32, #tpu.memory_space<vmem>>, vector<1x1x4xf32>,
    %c0_19 = arith.constant 0 : index
    %c0_20 = arith.constant 0 : index
    %c0_21 = arith.constant 0 : index
    %29 = vector.load %arg6[%c0_19, %c0_20, %c0_21] : memref<1x1x4xf32, #tpu.memory_space<vmem>>, vector<1x1x4xf32>
    tpu.vector_store %arg6[%c0_19, %c0_20, %c0_21], %16 {strides = array<i32>} : memref<1x1x4xf32, #tpu.memory_space<vmem>>, vector<1x1x4xf32>,
    return
  }
  func.func @transform_0(%arg0: i32) -> (i32, i32, i32) {
    %c0_i32 = arith.constant 0 : i32
    %c0_i32_0 = arith.constant 0 : i32
    %c0_i32_1 = arith.constant 0 : i32
    return %arg0, %c0_i32, %c0_i32_0 : i32, i32, i32
  }
  func.func @transform_1(%arg0: i32) -> (i32, i32, i32) {
    %c0_i32 = arith.constant 0 : i32
    %c0_i32_0 = arith.constant 0 : i32
    %c0_i32_1 = arith.constant 0 : i32
    %c0_i32_2 = arith.constant 0 : i32
    return %c0_i32, %c0_i32_0, %c0_i32_1 : i32, i32, i32
  }
  func.func @transform_2(%arg0: i32) -> (i32, i32, i32) {
    %c0_i32 = arith.constant 0 : i32
    %c0_i32_0 = arith.constant 0 : i32
    %c0_i32_1 = arith.constant 0 : i32
    %c0_i32_2 = arith.constant 0 : i32
    return %c0_i32, %c0_i32_0, %c0_i32_1 : i32, i32, i32
  }
  func.func @transform_3(%arg0: i32) -> (i32, i32, i32) {
    %c0_i32 = arith.constant 0 : i32
    %c0_i32_0 = arith.constant 0 : i32
    %c0_i32_1 = arith.constant 0 : i32
    return %arg0, %c0_i32, %c0_i32_0 : i32, i32, i32
  }
  func.func @transform_4(%arg0: i32) -> (i32, i32, i32) {
    %c0_i32 = arith.constant 0 : i32
    %c0_i32_0 = arith.constant 0 : i32
    %c0_i32_1 = arith.constant 0 : i32
    return %arg0, %c0_i32, %c0_i32_0 : i32, i32, i32
  }
  func.func @transform_5(%arg0: i32) -> (i32, i32, i32) {
    %c0_i32 = arith.constant 0 : i32
    %c0_i32_0 = arith.constant 0 : i32
    %c0_i32_1 = arith.constant 0 : i32
    return %arg0, %c0_i32, %c0_i32_0 : i32, i32, i32
  }
}

</mosaic_0001>

<llo_original>
// kernel: tpu_custom_call.1
$region0: #{tpu_custom_call.1}
  #allocation0 [shape = 'u32[]', space=smem, size = 0x4, offset = 0x4, fixed_abs, tag = 'smem constant byte address 0x4 - core index']
  #allocation1 [shape = 'u32[144,128]{1,0:T(1,128)}', space=vmem, size = 0x12000, scoped, tag = 'internal scratch']
  %s0 = inlined_call_operand.vmem [shape: f32[2,8,4], index: 0, kind: input, shape index: {}]
  %s1 = inlined_call_operand.vmem [shape: f32[1,1,4], index: 1, kind: input, shape index: {}]
  %s2 = inlined_call_operand.vmem [shape: f32[1,1,4], index: 2, kind: input, shape index: {}]
  %s3 = inlined_call_operand.vmem [shape: f32[2,8,4], index: 3, kind: output, shape index: {0}]
  %s4 = inlined_call_operand.hbm [shape: f32[2,1,4], index: 4, kind: output, shape index: {1}]
  %s5 = inlined_call_operand.hbm [shape: f32[2,1,4], index: 5, kind: output, shape index: {2}]
  %6 = xla_tuple %s3, %s4, %s5
  %s7 = sld [smem:[#allocation0]]
  $region61: #{tpu_custom_call.1} parent=0
    _
  %s9 = ssub.s32 1, %s7
  %s10 = scalar_select 0, %s9, %s7
  $region1: #{tpu_custom_call.1} parent=0
    #allocation2 [shape = 'u8[1024]{0}', space=vmem, size = 0x400, scoped, tag = 'output window, operand 1']
    #allocation3 [shape = 's32[2]{0}', space=sflag, size = 0x8, scoped, tag = 'scoped memory for tpu_custom_call.1']
    #allocation4 [shape = 'u8[1024]{0}', space=vmem, size = 0x400, scoped, tag = 'output window, operand 2']
    #allocation5 [shape = 's32[2]{0}', space=sflag, size = 0x8, scoped, tag = 'scoped memory for tpu_custom_call.1']
    %11 = vsyncpa [#allocation3], 0
    %s12 = scalar_lea.sflag [#allocation3], 1
    %13 = vsyncpa %s12, 0
    %14 = vsyncpa [#allocation5], 0
    %s15 = scalar_lea.sflag [#allocation5], 1
    %16 = vsyncpa %s15, 0
    loop: start=0, step=1, limit=4
    $region2: #{tpu_custom_call.1} parent=1 // loop_pre_header
      _
    $region3: #{tpu_custom_call.1} parent=1 // loop_header
      %s18 = sphi 0, %s22
      %p19 = scmp.ge.s32.totalorder %s18, 4
      %s28 = sphi 0, %s30
      %s31 = sphi 0, %s28
      %s32 = sphi 0, %s31
      %s48 = sphi 0, %s32
      %s52 = sphi 0, %s52
      %s54 = sphi 0, %s52
      %s55 = sphi 0, %s54
      %s69 = sphi 0, %s55
      %s73 = sphi 0, %s73
      %s75 = sphi 0, %s73
      %s76 = sphi 0, %s75
      %s90 = sphi 0, %s76
      %s96 = sphi 0, %s98
      %s99 = sphi 0, %s96
      %s100 = sphi 0, %s99
      %s116 = sphi 0, %s100
      %s122 = sphi 0, %s124
      %s125 = sphi 0, %s122
      %s126 = sphi 0, %s125
      %s142 = sphi 0, %s126
      %s148 = sphi 0, %s150
      %s151 = sphi 0, %s148
      %s152 = sphi 0, %s151
      %s168 = sphi 0, %s152
    $region4: #{tpu_custom_call.1} parent=1 // loop_header_branch
      %21 = sbr.rel (%p19) target = $region8
    $region5: #{tpu_custom_call.1} parent=1 // loop_body
      %s23 = ssub.s32 %s18, 1
      %s24 = ssub.s32 %s18, 2
      %s25 = sadd.s32 %s18, 1
      %s26 = ssub.s32 %s18, %s25
      %p27 = scmp.eq.s32.totalorder %s26, 0
      %s29 = sadd.s32 %s28, 1
      %s30 = scalar_select %p27, %s28, %s29
      %p33 = pneg %p27
      %p34 = scmp.eq.s32.totalorder %s18, 1
      %p35 = por %p33, %p34
      %p36 = scmp.ne.s32.totalorder %s28, %s31
      %p37 = scmp.eq.s32.totalorder %s18, 0
      %p38 = por %p36, %p37
      %p39 = scmp.ne.s32.totalorder %s28, %s31
      %p40 = scmp.eq.s32.totalorder %s23, 1
      %p41 = por %p39, %p40
      %p42 = scmp.ne.s32.totalorder %s31, %s32
      %p43 = scmp.eq.s32.totalorder %s23, 0
      %p44 = por %p42, %p43
      %p45 = scmp.ne.s32.totalorder %s31, %s32
      %p46 = scmp.eq.s32.totalorder %s24, 1
      %p47 = por %p45, %p46
      %p49 = scmp.ne.s32.totalorder %s32, %s48
      %p50 = scmp.eq.s32.totalorder %s24, 0
      %p51 = por %p49, %p50
      %s53 = sadd.s32 %s52, 1
      %p56 = scmp.eq.s32.totalorder %s18, 1
      %p57 = scmp.ne.s32.totalorder %s52, %s54
      %p58 = scmp.eq.s32.totalorder %s18, 0
      %p59 = por %p57, %p58
      %p60 = scmp.ne.s32.totalorder %s52, %s54
      %p61 = scmp.eq.s32.totalorder %s23, 1
      %p62 = por %p60, %p61
      %p63 = scmp.ne.s32.totalorder %s54, %s55
      %p64 = scmp.eq.s32.totalorder %s23, 0
      %p65 = por %p63, %p64
      %p66 = scmp.ne.s32.totalorder %s54, %s55
      %p67 = scmp.eq.s32.totalorder %s24, 1
      %p68 = por %p66, %p67
      %p70 = scmp.ne.s32.totalorder %s55, %s69
      %p71 = scmp.eq.s32.totalorder %s24, 0
      %p72 = por %p70, %p71
      %s74 = sadd.s32 %s73, 1
      %p77 = scmp.eq.s32.totalorder %s18, 1
      %p78 = scmp.ne.s32.totalorder %s73, %s75
      %p79 = scmp.eq.s32.totalorder %s18, 0
      %p80 = por %p78, %p79
      %p81 = scmp.ne.s32.totalorder %s73, %s75
      %p82 = scmp.eq.s32.totalorder %s23, 1
      %p83 = por %p81, %p82
      %p84 = scmp.ne.s32.totalorder %s75, %s76
      %p85 = scmp.eq.s32.totalorder %s23, 0
      %p86 = por %p84, %p85
      %p87 = scmp.ne.s32.totalorder %s75, %s76
      %p88 = scmp.eq.s32.totalorder %s24, 1
      %p89 = por %p87, %p88
      %p91 = scmp.ne.s32.totalorder %s76, %s90
      %p92 = scmp.eq.s32.totalorder %s24, 0
      %p93 = por %p91, %p92
      %s94 = ssub.s32 %s18, %s25
      %p95 = scmp.eq.s32.totalorder %s94, 0
      %s97 = sadd.s32 %s96, 1
      %s98 = scalar_select %p95, %s96, %s97
      %p101 = pneg %p95
      %p102 = scmp.eq.s32.totalorder %s18, 1
      %p103 = por %p101, %p102
      %p104 = scmp.ne.s32.totalorder %s96, %s99
      %p105 = scmp.eq.s32.totalorder %s18, 0
      %p106 = por %p104, %p105
      %p107 = scmp.ne.s32.totalorder %s96, %s99
      %p108 = scmp.eq.s32.totalorder %s23, 1
      %p109 = por %p107, %p108
      %p110 = scmp.ne.s32.totalorder %s99, %s100
      %p111 = scmp.eq.s32.totalorder %s23, 0
      %p112 = por %p110, %p111
      %p113 = scmp.ne.s32.totalorder %s99, %s100
      %p114 = scmp.eq.s32.totalorder %s24, 1
      %p115 = por %p113, %p114
      %p117 = scmp.ne.s32.totalorder %s100, %s116
      %p118 = scmp.eq.s32.totalorder %s24, 0
      %p119 = por %p117, %p118
      %s120 = ssub.s32 %s18, %s25
      %p121 = scmp.eq.s32.totalorder %s120, 0
      %s123 = sadd.s32 %s122, 1
      %s124 = scalar_select %p121, %s122, %s123
      %p127 = pneg %p121
      %p128 = scmp.eq.s32.totalorder %s18, 1
      %p129 = por %p127, %p128
      %p130 = scmp.ne.s32.totalorder %s122, %s125
      %p131 = scmp.eq.s32.totalorder %s18, 0
      %p132 = por %p130, %p131
      %p133 = scmp.ne.s32.totalorder %s122, %s125
      %p134 = scmp.eq.s32.totalorder %s23, 1
      %p135 = por %p133, %p134
      %p136 = scmp.ne.s32.totalorder %s125, %s126
      %p137 = scmp.eq.s32.totalorder %s23, 0
      %p138 = por %p136, %p137
      %p139 = scmp.ne.s32.totalorder %s125, %s126
      %p140 = scmp.eq.s32.totalorder %s24, 1
      %p141 = por %p139, %p140
      %p143 = scmp.ne.s32.totalorder %s126, %s142
      %p144 = scmp.eq.s32.totalorder %s24, 0
      %p145 = por %p143, %p144
      %s146 = ssub.s32 %s18, %s25
      %p147 = scmp.eq.s32.totalorder %s146, 0
      %s149 = sadd.s32 %s148, 1
      %s150 = scalar_select %p147, %s148, %s149
      %p153 = pneg %p147
      %p154 = scmp.eq.s32.totalorder %s18, 1
      %p155 = por %p153, %p154
      %p156 = scmp.ne.s32.totalorder %s148, %s151
      %p157 = scmp.eq.s32.totalorder %s18, 0
      %p158 = por %p156, %p157
      %p159 = scmp.ne.s32.totalorder %s148, %s151
      %p160 = scmp.eq.s32.totalorder %s23, 1
      %p161 = por %p159, %p160
      %p162 = scmp.ne.s32.totalorder %s151, %s152
      %p163 = scmp.eq.s32.totalorder %s23, 0
      %p164 = por %p162, %p163
      %p165 = scmp.ne.s32.totalorder %s151, %s152
      %p166 = scmp.eq.s32.totalorder %s24, 1
      %p167 = por %p165, %p166
      %p169 = scmp.ne.s32.totalorder %s152, %s168
      %p170 = scmp.eq.s32.totalorder %s24, 0
      %p171 = por %p169, %p170
      %p172 = scmp.le.s32.totalorder 1, %s18
      %p173 = scmp.lt.s32.totalorder %s18, 3
      %p174 = pnand %p172, %p173
      %p175 = pneg %p174
      // Predicated region
      $region9: #{tpu_custom_call.1} parent=5 // pred_check
        _
      $region10: #{tpu_custom_call.1} parent=5 // pred_check_branch
        %177 = sbr.rel (%p174) target = $region12
      $region11: #{tpu_custom_call.1} parent=5 // pred_region
        %s178 = ssub.s32 %s18, 1
        // Predicated region
        $region13: #{tpu_custom_call.1} parent=11 // pred_check
          %p179 = pneg %p65
        $region14: #{tpu_custom_call.1} parent=11 // pred_check_branch
          %181 = sbr.rel (%p179) target = $region16
        $region15: #{tpu_custom_call.1} parent=11 // pred_region
          _
        $region16: #{tpu_custom_call.1} parent=11 // pred_fallthru
          _
        // Predicated region
        $region17: #{tpu_custom_call.1} parent=11 // pred_check
          %p182 = pneg %p86
        $region18: #{tpu_custom_call.1} parent=11 // pred_check_branch
          %184 = sbr.rel (%p182) target = $region20
        $region19: #{tpu_custom_call.1} parent=11 // pred_region
          _
        $region20: #{tpu_custom_call.1} parent=11 // pred_fallthru
          _
      $region12: #{tpu_custom_call.1} parent=5 // pred_fallthru
        _
      %p185 = scmp.lt.s32.totalorder %s18, 2
      // Predicated region
      $region21: #{tpu_custom_call.1} parent=5 // pred_check
        %p186 = pneg %p185
      $region22: #{tpu_custom_call.1} parent=5 // pred_check_branch
        %188 = sbr.rel (%p186) target = $region24
      $region23: #{tpu_custom_call.1} parent=5 // pred_region
        // Predicated region
        $region25: #{tpu_custom_call.1} parent=23 // pred_check
          %p189 = pneg %p38
        $region26: #{tpu_custom_call.1} parent=23 // pred_check_branch
          %191 = sbr.rel (%p189) target = $region28
        $region27: #{tpu_custom_call.1} parent=23 // pred_region
          %p192 = scmp.lt.s32.totalorder %s18, 1
          %s193 = scalar_select %p192, %s18, 1
          %s194 = smul.addr %s193, 8
          %s195 = scalar_lea.vmem %s0, %s194
        $region28: #{tpu_custom_call.1} parent=23 // pred_fallthru
          _
      $region24: #{tpu_custom_call.1} parent=5 // pred_fallthru
        _
      %p196 = scmp.le.s32.totalorder 1, %s18
      %p197 = scmp.lt.s32.totalorder %s18, 3
      %p198 = pnand %p196, %p197
      %p199 = pneg %p198
      // Predicated region
      $region29: #{tpu_custom_call.1} parent=5 // pred_check
        _
      $region30: #{tpu_custom_call.1} parent=5 // pred_check_branch
        %201 = sbr.rel (%p198) target = $region32
      $region31: #{tpu_custom_call.1} parent=5 // pred_region
        %s202 = ssub.s32 %s18, 1
        %p203 = scmp.lt.s32.totalorder %s23, 1
        %s204 = scalar_select %p203, %s23, 1
        %s205 = smul.addr %s204, 8
        %s206 = scalar_lea.vmem %s0, %s205
        %p207 = pneg %p44
        %p208 = pneg %p41
        %p209 = pneg %p65
        %p210 = pneg %p62
        %p211 = pneg %p86
        %p212 = pneg %p83
        %p213 = pneg %p112
        %p214 = pneg %p109
        %p215 = scmp.lt.s32.totalorder %s23, 1
        %s216 = scalar_select %p215, %s23, 1
        %s217 = smul.addr %s216, 8
        %s218 = scalar_lea.vmem %s3, %s217
        %p219 = pneg %p138
        %p220 = pneg %p135
        %s221 = sand.u32 %s125, 1
        %s222 = scalar_lea.sflag [#allocation3], %s221
        %s223 = sand.u32 %s125, 1
        %s224 = scalar_lea.vmem [#allocation2], %s223
        %p225 = pneg %p164
        %p226 = pneg %p161
        %s227 = sand.u32 %s151, 1
        %s228 = scalar_lea.sflag [#allocation5], %s227
        %s229 = sand.u32 %s151, 1
        %s230 = scalar_lea.vmem [#allocation4], %s229
        %p231 = scmp.lt.s32.totalorder %s23, 1
        %s232 = scalar_select %p231, %s23, 1
        %s233 = smul.addr %s232, 8
        %s234 = scalar_lea.vmem %s0, %s233
        %p235 = scmp.lt.s32.totalorder %s23, 1
        %s236 = scalar_select %p235, %s23, 1
        %s237 = smul.addr %s236, 8
        %s238 = scalar_lea.vmem %s3, %s237
        %v239 = vld [vmem:[%s234] sm:$0xff]
        %vm240 = vcmask 31744
        %v241 = vsel %vm240, %v239, 0.0
        %v242 = vrot.slane %v241, 4
        %v243 = vadd.f32 %v241, %v242
        %v244 = vrot.slane %v243, 2
        %v245 = vadd.f32 %v243, %v244
        %v246 = vrot.slane %v245, 1
        %v247 = vadd.f32 %v245, %v246
        %v248 = vmul.f32 %v247, 0.125
        %v249 = vmul.f32 %v239, %v239
        %v250 = vsel %vm240, %v249, 0.0
        %v251 = vrot.slane %v250, 4
        %v252 = vadd.f32 %v250, %v251
        %v253 = vrot.slane %v252, 2
        %v254 = vadd.f32 %v252, %v253
        %v255 = vrot.slane %v254, 1
        %v256 = vadd.f32 %v254, %v255
        %v257 = vmul.f32 %v256, 0.125
        %v258 = vmul.f32 %v248, %v248
        %v259 = vsub.f32 %v257, %v258
        %v260 = vmax.f32 %v259, 0.0
        %v261 = vadd.f32 %v260, 1e-05
        %v262 = vrsqrt.pop %v261
        %v263 = vmul.f32 %v261, %v262
        %vm264 = vcmp.eq.f32.partialorder %v261, inf
        %v265 = vsel %vm264, %v261, %v263
        %vm266 = vcmp.eq.f32.partialorder %v261, 0.0
        %v267 = vand.u32 %v261, 2147483648
        %v268 = vsel %vm266, %v267, %v265
        %v269 = vrsqrt.pop %v261
        %v270 = vld [vmem:[%s1] sm:$0x1]
        %v271 = vmul.f32 %v270, %v269
        %v272 = vld [vmem:[%s2] sm:$0x1]
        %v273 = vmul.f32 %v248, %v271
        %v274 = vsub.f32 %v272, %v273
        %v276 = vlaneseq
        %v277 = vshrl.u32 %v276, 7
        %v278 = vsub.s32 0, %v277
        %v279 = vrot.slane %v271, %v278
        %v281 = vmul.f32 %v239, %v279
        %v283 = vlaneseq
        %v284 = vshrl.u32 %v283, 7
        %v285 = vsub.s32 0, %v284
        %v286 = vrot.slane %v274, %v285
        %v288 = vadd.f32 %v281, %v286
        %289 = vst.msk [vmem:[%s238] sm:$0xff] %vm240, %v288
        %vm290 = vcmask 24576
        %291 = vst.msk [vmem:[%s224] sm:$0x1] %vm290, %v248
        %292 = vst.msk [vmem:[%s230] sm:$0x1] %vm290, %v268
        %p293 = scmp.lt.s32.totalorder %s23, 1
        %s294 = scalar_select %p293, %s23, 1
        %s295 = smul.addr %s294, 8
        %s296 = scalar_lea.vmem %s3, %s295
        %s297 = sand.u32 %s125, 1
        %s298 = scalar_lea.sflag [#allocation3], %s297
        %s299 = sand.u32 %s125, 1
        %s300 = scalar_lea.vmem [#allocation2], %s299
        %s301 = sand.u32 %s151, 1
        %s302 = scalar_lea.sflag [#allocation5], %s301
        %s303 = sand.u32 %s151, 1
        %s304 = scalar_lea.vmem [#allocation4], %s303
        // Predicated region
        $region33: #{tpu_custom_call.1} parent=31 // pred_check
          %p305 = pneg %p109
        $region34: #{tpu_custom_call.1} parent=31 // pred_check_branch
          %307 = sbr.rel (%p305) target = $region36
        $region35: #{tpu_custom_call.1} parent=31 // pred_region
          _
        $region36: #{tpu_custom_call.1} parent=31 // pred_fallthru
          _
        // Predicated region
        $region37: #{tpu_custom_call.1} parent=31 // pred_check
          %p308 = pneg %p135
        $region38: #{tpu_custom_call.1} parent=31 // pred_check_branch
          %310 = sbr.rel (%p308) target = $region40
        $region39: #{tpu_custom_call.1} parent=31 // pred_region
          %s312 = ssub.s32 16, 16
          %313 = vsyncadd %s298, %s312
          %s314 = smul.addr %s23, 16
          %s315 = scalar_lea.hbm %s4, %s314
          %s317 = sshll.u32 %s300, 4
          %s318 = int_to_ptr.vmem [resolvable:$true] %s317
          %320 = dma.vmem_to_hbm [thread:$0]  %s318, 16, %s315, %s298
        $region40: #{tpu_custom_call.1} parent=31 // pred_fallthru
          _
        // Predicated region
        $region41: #{tpu_custom_call.1} parent=31 // pred_check
          %p321 = pneg %p161
        $region42: #{tpu_custom_call.1} parent=31 // pred_check_branch
          %323 = sbr.rel (%p321) target = $region44
        $region43: #{tpu_custom_call.1} parent=31 // pred_region
          %s325 = ssub.s32 16, 16
          %326 = vsyncadd %s302, %s325
          %s327 = smul.addr %s23, 16
          %s328 = scalar_lea.hbm %s5, %s327
          %s330 = sshll.u32 %s304, 4
          %s331 = int_to_ptr.vmem [resolvable:$true] %s330
          %333 = dma.vmem_to_hbm [thread:$0]  %s331, 16, %s328, %s302
        $region44: #{tpu_custom_call.1} parent=31 // pred_fallthru
          _
      $region32: #{tpu_custom_call.1} parent=5 // pred_fallthru
        _
      %p334 = scmp.le.s32.totalorder 2, %s18
      // Predicated region
      $region45: #{tpu_custom_call.1} parent=5 // pred_check
        %p335 = pneg %p334
      $region46: #{tpu_custom_call.1} parent=5 // pred_check_branch
        %337 = sbr.rel (%p335) target = $region48
      $region47: #{tpu_custom_call.1} parent=5 // pred_region
        %s338 = ssub.s32 %s18, 2
        // Predicated region
        $region49: #{tpu_custom_call.1} parent=47 // pred_check
          %p339 = pneg %p115
        $region50: #{tpu_custom_call.1} parent=47 // pred_check_branch
          %341 = sbr.rel (%p339) target = $region52
        $region51: #{tpu_custom_call.1} parent=47 // pred_region
          %p342 = scmp.lt.s32.totalorder %s24, 1
          %s343 = scalar_select %p342, %s24, 1
          %s344 = smul.addr %s343, 8
          %s345 = scalar_lea.vmem %s3, %s344
        $region52: #{tpu_custom_call.1} parent=47 // pred_fallthru
          _
        // Predicated region
        $region53: #{tpu_custom_call.1} parent=47 // pred_check
          %p346 = pneg %p141
        $region54: #{tpu_custom_call.1} parent=47 // pred_check_branch
          %348 = sbr.rel (%p346) target = $region56
        $region55: #{tpu_custom_call.1} parent=47 // pred_region
          %s349 = sand.u32 %s126, 1
          %s350 = scalar_lea.sflag [#allocation3], %s349
          %s351 = sand.u32 %s126, 1
          %s352 = scalar_lea.vmem [#allocation2], %s351
          %353 = dma.done %s350, 16
        $region56: #{tpu_custom_call.1} parent=47 // pred_fallthru
          _
        // Predicated region
        $region57: #{tpu_custom_call.1} parent=47 // pred_check
          %p354 = pneg %p167
        $region58: #{tpu_custom_call.1} parent=47 // pred_check_branch
          %356 = sbr.rel (%p354) target = $region60
        $region59: #{tpu_custom_call.1} parent=47 // pred_region
          %s357 = sand.u32 %s152, 1
          %s358 = scalar_lea.sflag [#allocation5], %s357
          %s359 = sand.u32 %s152, 1
          %s360 = scalar_lea.vmem [#allocation4], %s359
          %361 = dma.done %s358, 16
        $region60: #{tpu_custom_call.1} parent=47 // pred_fallthru
          _
      $region48: #{tpu_custom_call.1} parent=5 // pred_fallthru
        _
    $region6: #{tpu_custom_call.1} parent=1 // loop_footer
      %s22 = sadd.s32 1, %s18
    $region7: #{tpu_custom_call.1} parent=1 // loop_footer_branch
      %17 = sbr.rel target = $region3
    $region8: #{tpu_custom_call.1} parent=1 // loop_exit
      _
    %362 = vsyncpa [#allocation3], 1
    %s363 = scalar_lea.sflag [#allocation3], 1
    %364 = vsyncpa %s363, 1
    %365 = vsyncpa [#allocation5], 1
    %s366 = scalar_lea.sflag [#allocation5], 1
    %367 = vsyncpa %s366, 1

</llo_original>
